<compile_context>
chip_gen: v7x
topology: tpu7x:2x2x1
jax: 0.10.0
libtpu: 0.0.40
codegen_flags: <defaults>
</compile_context>

<pallas_src>
import jax
import jax.numpy as jnp
from jax.experimental import pallas as pl
from jax.experimental.pallas import tpu as pltpu

PAD_OUT = 128        # lane-dense classifier width (multiple of 128)
NEG_INF = -1e30      # padded-logit bias -> exp() underflows to exactly 0


# ---------------------------------------------------------------------------
# Kernel
# ---------------------------------------------------------------------------
def net_kernel(x_ref, w1_ref, t1_ref, w2_ref, t2_ref, w3_ref, b3_ref, o_ref):
    # ---- layer1: Linear (BN scale pre-folded into w1) + shift + ReLU ----
    h1 = jnp.dot(x_ref[...], w1_ref[...], preferred_element_type=jnp.float32)
    h1 = jnp.maximum(h1 + t1_ref[...], 0.0).astype(jnp.bfloat16)

    # ---- layer2: Linear (BN scale pre-folded into w2) + shift + ReLU ----
    h2 = jnp.dot(h1, w2_ref[...], preferred_element_type=jnp.float32)
    h2 = jnp.maximum(h2 + t2_ref[...], 0.0).astype(jnp.bfloat16)

    # ---- out: Linear (padded to 128 lanes) + softmax over padded row ----
    logits = jnp.dot(h2, w3_ref[...], preferred_element_type=jnp.float32)
    logits = logits + b3_ref[...]                 # padded cols get -1e30
    m = jnp.max(logits, axis=1, keepdims=True)    # padded cols never win the max
    e = jnp.exp(logits - m)                       # padded cols -> exactly 0
    denom = jnp.sum(e, axis=1, keepdims=True)
    o_ref[...] = e * pl.reciprocal(denom, approx=False)


# ---------------------------------------------------------------------------
# Parameter preparation (once, outside the per-call hot path)
# ---------------------------------------------------------------------------
def prepare_params(params, eps=1e-5):
    (w1, b1, g1, be1, mu1, var1,
     w2, b2, g2, be2, mu2, var2,
     w3, b3) = params

    # Eval-mode BatchNorm1d folded into per-feature scale/shift.
    s1 = g1 / jnp.sqrt(var1 + eps)
    t1 = (b1 - mu1) * s1 + be1
    s2 = g2 / jnp.sqrt(var2 + eps)
    t2 = (b2 - mu2) * s2 + be2

    # Fold the BN scale into the weight columns; store weights as bf16.
    w1f = (w1 * s1[None, :]).astype(jnp.bfloat16)
    w2f = (w2 * s2[None, :]).astype(jnp.bfloat16)

    out_dim = w3.shape[1]
    assert out_dim <= PAD_OUT, "classifier wider than padded lane width"
    pad = PAD_OUT - out_dim
    # Zero-padded weight columns; bias padded with -1e30 so softmax is unchanged.
    w3p = jnp.pad(w3, ((0, 0), (0, pad))).astype(jnp.bfloat16)
    b3p = jnp.pad(b3, (0, pad), constant_values=NEG_INF).astype(jnp.float32)

    return dict(
        w1=w1f, t1=t1.reshape(1, -1).astype(jnp.float32),
        w2=w2f, t2=t2.reshape(1, -1).astype(jnp.float32),
        w3=w3p, b3=b3p.reshape(1, -1),
        out_dim=out_dim,
    )


# ---------------------------------------------------------------------------
# Forward wrapper
# ---------------------------------------------------------------------------
def net_forward(x_img, prep):
    """x_img: (B, C, H, W) float32, NCHW like PyTorch."""
    B = x_img.shape[0]
    x = x_img.reshape(B, -1).astype(jnp.bfloat16)           # Flatten + bf16 (glue)

    vmem = pl.BlockSpec(memory_space=pltpu.MemorySpace.VMEM)
    out_padded = pl.pallas_call(
        net_kernel,
        out_shape=jax.ShapeDtypeStruct((B, PAD_OUT), jnp.float32),
        in_specs=[vmem] * 7,
        out_specs=vmem,
    )(x, prep["w1"], prep["t1"], prep["w2"], prep["t2"], prep["w3"], prep["b3"])

    return out_padded[:, :prep["out_dim"]]                   # drop padded classes (glue)


# ---------------------------------------------------------------------------
# Parameter construction & references
# ---------------------------------------------------------------------------
def make_params(key, in_dim, h1, h2, out_dim):
    ks = jax.random.split(key, 10)
    w1 = jax.random.normal(ks[0], (in_dim, h1), jnp.float32) * 0.05
    b1 = jax.random.normal(ks[1], (h1,), jnp.float32) * 0.05
    g1 = 1.0 + 0.1 * jax.random.normal(ks[2], (h1,), jnp.float32)
    be1 = 0.1 * jax.random.normal(ks[3], (h1,), jnp.float32)
    mu1 = 0.1 * jax.random.normal(ks[4], (h1,), jnp.float32)
    var1 = jnp.abs(1.0 + 0.1 * jax.random.normal(ks[5], (h1,), jnp.float32))

    w2 = jax.random.normal(ks[6], (h1, h2), jnp.float32) * 0.05
    b2 = jax.random.normal(ks[7], (h2,), jnp.float32) * 0.05
    g2 = jnp.ones((h2,), jnp.float32)
    be2 = jnp.zeros((h2,), jnp.float32)
    mu2 = jnp.zeros((h2,), jnp.float32)
    var2 = jnp.ones((h2,), jnp.float32)

    w3 = jax.random.normal(ks[8], (h2, out_dim), jnp.float32) * 0.05
    b3 = jax.random.normal(ks[9], (out_dim,), jnp.float32) * 0.05
    return (w1, b1, g1, be1, mu1, var1,
            w2, b2, g2, be2, mu2, var2,
            w3, b3)


def reference_forward_f32(x_img, params):
    """Plain-JAX f32 reference replicating the PyTorch forward (BN eval mode)."""
    (w1, b1, g1, be1, mu1, var1,
     w2, b2, g2, be2, mu2, var2,
     w3, b3) = params
    eps = 1e-5
    x = x_img.reshape(x_img.shape[0], -1)
    h = x @ w1 + b1
    h = (h - mu1) / jnp.sqrt(var1 + eps) * g1 + be1
    h = jnp.maximum(h, 0.0)
    h = h @ w2 + b2
    h = (h - mu2) / jnp.sqrt(var2 + eps) * g2 + be2
    h = jnp.maximum(h, 0.0)
    logits = h @ w3 + b3
    return jax.nn.softmax(logits, axis=1)


def reference_forward_emulated(x_img, prep):
    """Plain-JAX reference using the same bf16-folded/padded params as the kernel."""
    x = x_img.reshape(x_img.shape[0], -1).astype(jnp.bfloat16)
    h1 = jnp.dot(x, prep["w1"], preferred_element_type=jnp.float32) + prep["t1"]
    h1 = jnp.maximum(h1, 0.0).astype(jnp.bfloat16)
    h2 = jnp.dot(h1, prep["w2"], preferred_element_type=jnp.float32) + prep["t2"]
    h2 = jnp.maximum(h2, 0.0).astype(jnp.bfloat16)
    logits = jnp.dot(h2, prep["w3"], preferred_element_type=jnp.float32) + prep["b3"]
    return jax.nn.softmax(logits, axis=1)[:, :prep["out_dim"]]


if __name__ == "__main__":
    # MNIST-like small shapes: B=8, 1x16x16 images -> in_dim=256, 10 classes.
    B, C, H, W = 8, 1, 16, 16
    in_dim, n_hidden_1, n_hidden_2, out_dim = C * H * W, 128, 64, 10

    key = jax.random.PRNGKey(0)
    kx, kp = jax.random.split(key)
    x_img = jax.random.normal(kx, (B, C, H, W), jnp.float32)
    params = make_params(kp, in_dim, n_hidden_1, n_hidden_2, out_dim)
    prep = prepare_params(params)

    out = net_forward(x_img, prep)
    out = jax.block_until_ready(out)
    assert out.shape == (B, out_dim)

    # Strict check: kernel matches a plain-JAX emulation of the same bf16 math.
    ref_emu = reference_forward_emulated(x_img, prep)
    assert jnp.allclose(out, ref_emu, atol=1e-4, rtol=1e-4), "mismatch vs emulated bf16 reference"

    # Fidelity check: close to the original f32 PyTorch-style forward.
    ref_f32 = reference_forward_f32(x_img, params)
    assert jnp.allclose(out, ref_f32, atol=5e-3, rtol=5e-3), "mismatch vs f32 reference"

    # Rows still sum to ~1 (padding did not perturb the softmax denominator).
    assert jnp.allclose(jnp.sum(out, axis=1), 1.0, atol=1e-4)

    print("KERNEL_OK")
</pallas_src>

<mosaic_0001>
module attributes {stable_mosaic.version = 11 : i64} {
  func.func @net_kernel(%arg0: memref<8x256xbf16, #tpu.memory_space<vmem>>, %arg1: memref<256x128xbf16, #tpu.memory_space<vmem>>, %arg2: memref<1x128xf32, #tpu.memory_space<vmem>>, %arg3: memref<128x64xbf16, #tpu.memory_space<vmem>>, %arg4: memref<1x64xf32, #tpu.memory_space<vmem>>, %arg5: memref<64x128xbf16, #tpu.memory_space<vmem>>, %arg6: memref<1x128xf32, #tpu.memory_space<vmem>>, %arg7: memref<8x128xf32, #tpu.memory_space<vmem>>) attributes {dimension_semantics = [], scalar_prefetch = 0 : i64, scratch_operands = 0 : i64, tpu.core_type = #tpu.core_type<tc>} {
    %c0 = arith.constant 0 : index
    %c0_0 = arith.constant 0 : index
    %0 = vector.load %arg0[%c0, %c0_0] : memref<8x256xbf16, #tpu.memory_space<vmem>>, vector<8x256xbf16>
    %c0_1 = arith.constant 0 : index
    %c0_2 = arith.constant 0 : index
    %1 = vector.load %arg1[%c0_1, %c0_2] : memref<256x128xbf16, #tpu.memory_space<vmem>>, vector<256x128xbf16>
    %cst = arith.constant dense<0.000000e+00> : vector<8x128xf32>
    %2 = tpu.matmul %0, %1, %cst {dimension_numbers = #tpu.dot_dimension_numbers<[1], [0], [0], [1], [0, 0, 1, 1], [], []>} : vector<8x256xbf16>, vector<256x128xbf16>, vector<8x128xf32> -> vector<8x128xf32>
    %c0_3 = arith.constant 0 : index
    %c0_4 = arith.constant 0 : index
    %3 = vector.load %arg2[%c0_3, %c0_4] : memref<1x128xf32, #tpu.memory_space<vmem>>, vector<1x128xf32>
    %4 = vector.broadcast %3 : vector<1x128xf32> to vector<8x128xf32>
    %5 = arith.addf %2, %4 : vector<8x128xf32>
    %cst_5 = arith.constant 0.000000e+00 : f32
    %6 = vector.broadcast %cst_5 : f32 to vector<8x128xf32>
    %7 = arith.maximumf %5, %6 : vector<8x128xf32>
    %8 = arith.truncf %7 : vector<8x128xf32> to vector<8x128xbf16>
    %c0_6 = arith.constant 0 : index
    %c0_7 = arith.constant 0 : index
    %9 = vector.load %arg3[%c0_6, %c0_7] : memref<128x64xbf16, #tpu.memory_space<vmem>>, vector<128x64xbf16>
    %cst_8 = arith.constant dense<0.000000e+00> : vector<8x64xf32>
    %10 = tpu.matmul %8, %9, %cst_8 {dimension_numbers = #tpu.dot_dimension_numbers<[1], [0], [0], [1], [0, 0, 1, 1], [], []>} : vector<8x128xbf16>, vector<128x64xbf16>, vector<8x64xf32> -> vector<8x64xf32>
    %c0_9 = arith.constant 0 : index
    %c0_10 = arith.constant 0 : index
    %11 = vector.load %arg4[%c0_9, %c0_10] : memref<1x64xf32, #tpu.memory_space<vmem>>, vector<1x64xf32>
    %12 = vector.broadcast %11 : vector<1x64xf32> to vector<8x64xf32>
    %13 = arith.addf %10, %12 : vector<8x64xf32>
    %cst_11 = arith.constant 0.000000e+00 : f32
    %14 = vector.broadcast %cst_11 : f32 to vector<8x64xf32>
    %15 = arith.maximumf %13, %14 : vector<8x64xf32>
    %16 = arith.truncf %15 : vector<8x64xf32> to vector<8x64xbf16>
    %c0_12 = arith.constant 0 : index
    %c0_13 = arith.constant 0 : index
    %17 = vector.load %arg5[%c0_12, %c0_13] : memref<64x128xbf16, #tpu.memory_space<vmem>>, vector<64x128xbf16>
    %cst_14 = arith.constant dense<0.000000e+00> : vector<8x128xf32>
    %18 = tpu.matmul %16, %17, %cst_14 {dimension_numbers = #tpu.dot_dimension_numbers<[1], [0], [0], [1], [0, 0, 1, 1], [], []>} : vector<8x64xbf16>, vector<64x128xbf16>, vector<8x128xf32> -> vector<8x128xf32>
    %c0_15 = arith.constant 0 : index
    %c0_16 = arith.constant 0 : index
    %19 = vector.load %arg6[%c0_15, %c0_16] : memref<1x128xf32, #tpu.memory_space<vmem>>, vector<1x128xf32>
    %20 = vector.broadcast %19 : vector<1x128xf32> to vector<8x128xf32>
    %21 = arith.addf %18, %20 : vector<8x128xf32>
    %cst_17 = arith.constant dense<0xFF800000> : vector<8xf32>
    %22 = vector.multi_reduction <maximumf>, %21, %cst_17 [1] : vector<8x128xf32> to vector<8xf32>
    %23 = vector.shape_cast %22 : vector<8xf32> to vector<8x1xf32>
    %24 = vector.broadcast %23 : vector<8x1xf32> to vector<8x128xf32>
    %25 = arith.subf %21, %24 : vector<8x128xf32>
    %26 = math.exp %25 : vector<8x128xf32>
    %cst_18 = arith.constant dense<0.000000e+00> : vector<8xf32>
    %27 = vector.multi_reduction <add>, %26, %cst_18 [1] : vector<8x128xf32> to vector<8xf32>
    %28 = vector.shape_cast %27 : vector<8xf32> to vector<8x1xf32>
    %29 = tpu.reciprocal %28 : vector<8x1xf32> -> vector<8x1xf32>
    %30 = vector.broadcast %29 : vector<8x1xf32> to vector<8x128xf32>
    %31 = arith.mulf %26, %30 : vector<8x128xf32>
    %c0_19 = arith.constant 0 : index
    %c0_20 = arith.constant 0 : index
    %32 = vector.load %arg7[%c0_19, %c0_20] : memref<8x128xf32, #tpu.memory_space<vmem>>, vector<8x128xf32>
    tpu.vector_store %arg7[%c0_19, %c0_20], %31 {strides = array<i32>} : memref<8x128xf32, #tpu.memory_space<vmem>>, vector<8x128xf32>,
    return
  }
}

</mosaic_0001>

<llo_original>
// kernel: tpu_custom_call.1
$region0: #{tpu_custom_call.1}
  #allocation0 [shape = 'u32[]', space=smem, size = 0x4, offset = 0x4, fixed_abs, tag = 'smem constant byte address 0x4 - core index']
  #allocation1 [shape = 'u32[144,128]{1,0:T(1,128)}', space=vmem, size = 0x12000, scoped, tag = 'internal scratch']
  %s0 = inlined_call_operand.vmem [shape: bf16[8,256], index: 0, kind: input, shape index: {}]
  %s1 = inlined_call_operand.hbm [shape: bf16[256,128], index: 1, kind: input, shape index: {}]
  %s2 = inlined_call_operand.vmem [shape: f32[1,128], index: 2, kind: input, shape index: {}]
  %s3 = inlined_call_operand.vmem [shape: bf16[128,64], index: 3, kind: input, shape index: {}]
  %s4 = inlined_call_operand.vmem [shape: f32[1,64], index: 4, kind: input, shape index: {}]
  %s5 = inlined_call_operand.vmem [shape: bf16[64,128], index: 5, kind: input, shape index: {}]
  %s6 = inlined_call_operand.vmem [shape: f32[1,128], index: 6, kind: input, shape index: {}]
  %s7 = inlined_call_operand.hbm [shape: f32[8,128], index: 7, kind: output, shape index: {}]
  %s8 = sld [smem:[#allocation0]]
  $region42: #{tpu_custom_call.1} parent=0
    _
  %s10 = ssub.s32 1, %s8
  %s11 = scalar_select 0, %s10, %s8
  $region1: #{tpu_custom_call.1} parent=0
    #allocation2 [shape = 'u8[65536]{0}', space=vmem, size = 0x10000, scoped, tag = 'input window, operand 1, single buffered']
    #allocation3 [shape = 's32[1]{0}', space=sflag, size = 0x4, scoped, tag = 'scoped memory for tpu_custom_call.1']
    #allocation4 [shape = 's32[1]{0}', space=sflag, size = 0x4, scoped, tag = 'scoped memory for tpu_custom_call.1']
    #allocation5 [shape = 'u8[4096]{0}', space=vmem, size = 0x1000, scoped, tag = 'output window, operand 0, single buffered']
    %12 = vsyncpa [#allocation3], 0
    %13 = vsyncpa [#allocation4], 0
    // Predicated region
    $region2: #{tpu_custom_call.1} parent=1 // pred_check
      _
    $region3: #{tpu_custom_call.1} parent=1 // pred_check_branch
      %15 = sbr.rel (0) target = $region5
    $region4: #{tpu_custom_call.1} parent=1 // pred_region
      _
    $region5: #{tpu_custom_call.1} parent=1 // pred_fallthru
      _
    // Predicated region
    $region6: #{tpu_custom_call.1} parent=1 // pred_check
      _
    $region7: #{tpu_custom_call.1} parent=1 // pred_check_branch
      %17 = sbr.rel (0) target = $region9
    $region8: #{tpu_custom_call.1} parent=1 // pred_region
      %s19 = ssub.s32 2048, 2048
      %20 = vsyncadd [#allocation3], %s19
      %s21 = sshll.u32 [#allocation2], 4
      %s22 = int_to_ptr.vmem [resolvable:$true] %s21
      %27 = dma.hbm_to_vmem [thread:$0]  %s1, 2048, %s22, [#allocation3], 64, 64, 4
    $region9: #{tpu_custom_call.1} parent=1 // pred_fallthru
      _
    // Predicated region
    $region10: #{tpu_custom_call.1} parent=1 // pred_check
      _
    $region11: #{tpu_custom_call.1} parent=1 // pred_check_branch
      %29 = sbr.rel (0) target = $region13
    $region12: #{tpu_custom_call.1} parent=1 // pred_region
      _
    $region13: #{tpu_custom_call.1} parent=1 // pred_fallthru
      _
    // Predicated region
    $region14: #{tpu_custom_call.1} parent=1 // pred_check
      _
    $region15: #{tpu_custom_call.1} parent=1 // pred_check_branch
      %31 = sbr.rel (0) target = $region17
    $region16: #{tpu_custom_call.1} parent=1 // pred_region
      _
    $region17: #{tpu_custom_call.1} parent=1 // pred_fallthru
      _
    // Predicated region
    $region18: #{tpu_custom_call.1} parent=1 // pred_check
      _
    $region19: #{tpu_custom_call.1} parent=1 // pred_check_branch
      %33 = sbr.rel (0) target = $region21
    $region20: #{tpu_custom_call.1} parent=1 // pred_region
      _
    $region21: #{tpu_custom_call.1} parent=1 // pred_fallthru
      _
    // Predicated region
    $region22: #{tpu_custom_call.1} parent=1 // pred_check
      _
    $region23: #{tpu_custom_call.1} parent=1 // pred_check_branch
      %35 = sbr.rel (0) target = $region25
    $region24: #{tpu_custom_call.1} parent=1 // pred_region
      _
    $region25: #{tpu_custom_call.1} parent=1 // pred_fallthru
      _
    // Predicated region
    $region26: #{tpu_custom_call.1} parent=1 // pred_check
      _
    $region27: #{tpu_custom_call.1} parent=1 // pred_check_branch
      %37 = sbr.rel (0) target = $region29
    $region28: #{tpu_custom_call.1} parent=1 // pred_region
      _
    $region29: #{tpu_custom_call.1} parent=1 // pred_fallthru
      _
    // Predicated region
    $region30: #{tpu_custom_call.1} parent=1 // pred_check
      _
    $region31: #{tpu_custom_call.1} parent=1 // pred_check_branch
      %39 = sbr.rel (0) target = $region33
    $region32: #{tpu_custom_call.1} parent=1 // pred_region
      %40 = dma.done [#allocation3], 2048
    $region33: #{tpu_custom_call.1} parent=1 // pred_fallthru
      _
    %v42 = vld [vmem:[%s0] sm:$0xff]
    %v43 = vld [vmem:[#allocation2] sm:$0xf]
    %v44 = vld [vmem:[#allocation2 + $0x4] sm:$0xf]
    %v45 = vld [vmem:[#allocation2 + $0x8] sm:$0xf]
    %v46 = vld [vmem:[#allocation2 + $0xc] sm:$0xf]
    %v47 = vld [vmem:[#allocation2 + $0x10] sm:$0xf]
    %v48 = vld [vmem:[#allocation2 + $0x14] sm:$0xf]
    %v49 = vld [vmem:[#allocation2 + $0x18] sm:$0xf]
    %v50 = vld [vmem:[#allocation2 + $0x1c] sm:$0xf]
    %v51 = vld [vmem:[#allocation2 + $0x20] sm:$0xf]
    %v52 = vld [vmem:[#allocation2 + $0x24] sm:$0xf]
    %v53 = vld [vmem:[#allocation2 + $0x28] sm:$0xf]
    %v54 = vld [vmem:[#allocation2 + $0x2c] sm:$0xf]
    %v55 = vld [vmem:[#allocation2 + $0x30] sm:$0xf]
    %v56 = vld [vmem:[#allocation2 + $0x34] sm:$0xf]
    %v57 = vld [vmem:[#allocation2 + $0x38] sm:$0xf]
    %v58 = vld [vmem:[#allocation2 + $0x3c] sm:$0xf]
    %v59 = vld [vmem:[#allocation2 + $0x40] sm:$0xf]
    %v60 = vld [vmem:[#allocation2 + $0x44] sm:$0xf]
    %v61 = vld [vmem:[#allocation2 + $0x48] sm:$0xf]
    %v62 = vld [vmem:[#allocation2 + $0x4c] sm:$0xf]
    %v63 = vld [vmem:[#allocation2 + $0x50] sm:$0xf]
    %v64 = vld [vmem:[#allocation2 + $0x54] sm:$0xf]
    %v65 = vld [vmem:[#allocation2 + $0x58] sm:$0xf]
    %v66 = vld [vmem:[#allocation2 + $0x5c] sm:$0xf]
    %v67 = vld [vmem:[#allocation2 + $0x60] sm:$0xf]
    %v68 = vld [vmem:[#allocation2 + $0x64] sm:$0xf]
    %v69 = vld [vmem:[#allocation2 + $0x68] sm:$0xf]
    %v70 = vld [vmem:[#allocation2 + $0x6c] sm:$0xf]
    %v71 = vld [vmem:[#allocation2 + $0x70] sm:$0xf]
    %v72 = vld [vmem:[#allocation2 + $0x74] sm:$0xf]
    %v73 = vld [vmem:[#allocation2 + $0x78] sm:$0xf]
    %v74 = vld [vmem:[#allocation2 + $0x7c] sm:$0xf]
    %v75 = vld [vmem:[%s2] sm:$0x1]
    %v77 = vlaneseq
    %v78 = vshrl.u32 %v77, 7
    %v79 = vsub.s32 0, %v78
    %v80 = vrot.slane %v75, %v79
    %v83 = vunpack.c.l.b16 %v42
    %v84 = vunpack.c.h.b16 %v42
    %v85 = vpack.c.b16 %v83, %v83
    %v86 = vpack.c.b16 %v84, %v84
    %v121 = vunpack.c.l.b16 %v43
    %v122 = vunpack.c.l.b16 %v44
    %v123 = vunpack.c.l.b16 %v45
    %v124 = vunpack.c.l.b16 %v46
    %v125 = vunpack.c.l.b16 %v47
    %v126 = vunpack.c.l.b16 %v48
    %v127 = vunpack.c.l.b16 %v49
    %v128 = vunpack.c.l.b16 %v50
    %v129 = vunpack.c.l.b16 %v51
    %v130 = vunpack.c.l.b16 %v52
    %v131 = vunpack.c.l.b16 %v53
    %v132 = vunpack.c.l.b16 %v54
    %v133 = vunpack.c.l.b16 %v55
    %v134 = vunpack.c.l.b16 %v56
    %v135 = vunpack.c.l.b16 %v57
    %v136 = vunpack.c.l.b16 %v58
    %v137 = vunpack.c.l.b16 %v59
    %v138 = vunpack.c.l.b16 %v60
    %v139 = vunpack.c.l.b16 %v61
    %v140 = vunpack.c.l.b16 %v62
    %v141 = vunpack.c.l.b16 %v63
    %v142 = vunpack.c.l.b16 %v64
    %v143 = vunpack.c.l.b16 %v65
    %v144 = vunpack.c.l.b16 %v66
    %v145 = vunpack.c.l.b16 %v67
    %v146 = vunpack.c.l.b16 %v68
    %v147 = vunpack.c.l.b16 %v69
    %v148 = vunpack.c.l.b16 %v70
    %v149 = vunpack.c.l.b16 %v71
    %v150 = vunpack.c.l.b16 %v72
    %v151 = vunpack.c.l.b16 %v73
    %v152 = vunpack.c.l.b16 %v74
    %v153 = vpack.c.b16 %v122, %v121
    %v154 = vpack.c.b16 %v124, %v123
    %v155 = vpack.c.b16 %v126, %v125
    %v156 = vpack.c.b16 %v128, %v127
    %v157 = vpack.c.b16 %v130, %v129
    %v158 = vpack.c.b16 %v132, %v131
    %v159 = vpack.c.b16 %v134, %v133
    %v160 = vpack.c.b16 %v136, %v135
    %v161 = vpack.c.b16 %v138, %v137
    %v162 = vpack.c.b16 %v140, %v139
    %v163 = vpack.c.b16 %v142, %v141
    %v164 = vpack.c.b16 %v144, %v143
    %v165 = vpack.c.b16 %v146, %v145
    %v166 = vpack.c.b16 %v148, %v147
    %v167 = vpack.c.b16 %v150, %v149
    %v168 = vpack.c.b16 %v152, %v151
    %185 = vmatprep.subr.bf16.mxu0 0
    %186 = vmatpush1.bf16.msra.mxu0 %v153
    %187 = vmatprep.subr.bf16.mxu0 0
    %188 = vmatpush1.bf16.msra.mxu0 %v154
    %189 = vmatprep.subr.bf16.mxu0 0
    %190 = vmatpush1.bf16.msra.mxu0 %v155
    %191 = vmatprep.subr.bf16.mxu0 0
    %192 = vmatpush1.bf16.msra.mxu0 %v156
    %193 = vmatprep.subr.bf16.mxu0 0
    %194 = vmatpush1.bf16.msra.mxu0 %v157
    %195 = vmatprep.subr.bf16.mxu0 0
    %196 = vmatpush1.bf16.msra.mxu0 %v158
    %197 = vmatprep.subr.bf16.mxu0 0
    %198 = vmatpush1.bf16.msra.mxu0 %v159
    %199 = vmatprep.subr.bf16.mxu0 0
    %200 = vmatpush1.bf16.msra.mxu0 %v160
    %201 = vmatprep.subr.bf16.mxu0 0
    %202 = vmatpush1.bf16.msra.mxu0 %v161
    %203 = vmatprep.subr.bf16.mxu0 0
    %204 = vmatpush1.bf16.msra.mxu0 %v162
    %205 = vmatprep.subr.bf16.mxu0 0
    %206 = vmatpush1.bf16.msra.mxu0 %v163
    %207 = vmatprep.subr.bf16.mxu0 0
    %208 = vmatpush1.bf16.msra.mxu0 %v164
    %209 = vmatprep.subr.bf16.mxu0 0
    %210 = vmatpush1.bf16.msra.mxu0 %v165
    %211 = vmatprep.subr.bf16.mxu0 0
    %212 = vmatpush1.bf16.msra.mxu0 %v166
    %213 = vmatprep.subr.bf16.mxu0 0
    %214 = vmatpush1.bf16.msra.mxu0 %v167
    %215 = vmatprep.subr.bf16.mxu0 0
    %216 = vmatpush1.bf16.msra.mxu0 %v168
    %217 = vmatprep.mubr.bf16.mxu0 %v86
    %218 = vmatmul.mubr.bf16.gmra.mrb[0].mxu0 %v85
    %v219 = vpop.f32.mrb[0].mxu0
    %v220 = vadd.f32 %v80, %v219
    %v221 = vpop.f32.mrb[0].mxu0
    %v222 = vpop.f32.mrb[0].mxu0
    %v223 = vpop.f32.mrb[0].mxu0
    %224 = vdwg.mxu0
    %v225 = vmax.f32 %v220, 0.0
    %v226 = vpack.c.bf16 %v225, %v225
    %v227 = vld [vmem:[%s3] sm:$0xf]
    %v228 = vld [vmem:[%s3 + $0x4] sm:$0xf]
    %v229 = vld [vmem:[%s3 + $0x8] sm:$0xf]
    %v230 = vld [vmem:[%s3 + $0xc] sm:$0xf]
    %v231 = vld [vmem:[%s3 + $0x10] sm:$0xf]
    %v232 = vld [vmem:[%s3 + $0x14] sm:$0xf]
    %v233 = vld [vmem:[%s3 + $0x18] sm:$0xf]
    %v234 = vld [vmem:[%s3 + $0x1c] sm:$0xf]
    %v235 = vld [vmem:[%s3 + $0x20] sm:$0xf]
    %v236 = vld [vmem:[%s3 + $0x24] sm:$0xf]
    %v237 = vld [vmem:[%s3 + $0x28] sm:$0xf]
    %v238 = vld [vmem:[%s3 + $0x2c] sm:$0xf]
    %v239 = vld [vmem:[%s3 + $0x30] sm:$0xf]
    %v240 = vld [vmem:[%s3 + $0x34] sm:$0xf]
    %v241 = vld [vmem:[%s3 + $0x38] sm:$0xf]
    %v242 = vld [vmem:[%s3 + $0x3c] sm:$0xf]
    %v243 = vld [vmem:[%s4] sm:$0x1]
    %v245 = vlaneseq
    %v246 = vshrl.u32 %v245, 7
    %v247 = vsub.s32 0, %v246
    %v248 = vrot.slane %v243, %v247
    %v266 = vunpack.c.l.b16 %v227
    %v267 = vunpack.c.l.b16 %v228
    %v268 = vunpack.c.l.b16 %v229
    %v269 = vunpack.c.l.b16 %v230
    %v270 = vunpack.c.l.b16 %v231
    %v271 = vunpack.c.l.b16 %v232
    %v272 = vunpack.c.l.b16 %v233
    %v273 = vunpack.c.l.b16 %v234
    %v274 = vunpack.c.l.b16 %v235
    %v275 = vunpack.c.l.b16 %v236
    %v276 = vunpack.c.l.b16 %v237
    %v277 = vunpack.c.l.b16 %v238
    %v278 = vunpack.c.l.b16 %v239
    %v279 = vunpack.c.l.b16 %v240
    %v280 = vunpack.c.l.b16 %v241
    %v281 = vunpack.c.l.b16 %v242
    %v282 = vpack.c.b16 %v267, %v266
    %v283 = vpack.c.b16 %v269, %v268
    %v284 = vpack.c.b16 %v271, %v270
    %v285 = vpack.c.b16 %v273, %v272
    %v286 = vpack.c.b16 %v275, %v274
    %v287 = vpack.c.b16 %v277, %v276
    %v288 = vpack.c.b16 %v279, %v278
    %v289 = vpack.c.b16 %v281, %v280
    %298 = vmatprep.subr.bf16.mxu0 0
    %299 = vmatpush1.bf16.msra.mxu0 %v282
    %300 = vmatprep.subr.bf16.mxu0 0
    %301 = vmatpush1.bf16.msra.mxu0 %v283
    %302 = vmatprep.subr.bf16.mxu0 0
    %303 = vmatpush1.bf16.msra.mxu0 %v284
    %304 = vmatprep.subr.bf16.mxu0 0
    %305 = vmatpush1.bf16.msra.mxu0 %v285
    %306 = vmatprep.subr.bf16.mxu0 0
    %307 = vmatpush1.bf16.msra.mxu0 %v286
    %308 = vmatprep.subr.bf16.mxu0 0
    %309 = vmatpush1.bf16.msra.mxu0 %v287
    %310 = vmatprep.subr.bf16.mxu0 0
    %311 = vmatpush1.bf16.msra.mxu0 %v288
    %312 = vmatprep.subr.bf16.mxu0 0
    %313 = vmatpush1.bf16.msra.mxu0 %v289
    %314 = vmatprep.subr.bf16.mxu0 0
    %315 = vmatpush1.bf16.msra.mxu0 0
    %316 = vmatprep.subr.bf16.mxu0 0
    %317 = vmatpush1.bf16.msra.mxu0 0
    %318 = vmatprep.subr.bf16.mxu0 0
    %319 = vmatpush1.bf16.msra.mxu0 0
    %320 = vmatprep.subr.bf16.mxu0 0
    %321 = vmatpush1.bf16.msra.mxu0 0
    %322 = vmatprep.subr.bf16.mxu0 0
    %323 = vmatpush1.bf16.msra.mxu0 0
    %324 = vmatprep.subr.bf16.mxu0 0
    %325 = vmatpush1.bf16.msra.mxu0 0
    %326 = vmatprep.subr.bf16.mxu0 0
    %327 = vmatpush1.bf16.msra.mxu0 0
    %328 = vmatprep.subr.bf16.mxu0 0
    %329 = vmatpush1.bf16.msra.mxu0 0
    %330 = vmatprep.mubr.bf16.mxu0 0
    %331 = vmatmul.mubr.bf16.gmra.mrb[0].mxu0 %v226
    %v332 = vpop.f32.mrb[0].mxu0
    %v333 = vadd.f32 %v248, %v332
    %v334 = vpop.f32.mrb[0].mxu0
    %v335 = vpop.f32.mrb[0].mxu0
    %v336 = vpop.f32.mrb[0].mxu0
    %337 = vdwg.mxu0
    %v338 = vmax.f32 %v333, 0.0
    %v339 = vpack.c.bf16 %v338, %v338
    %v340 = vld [vmem:[%s5] sm:$0xf]
    %v341 = vld [vmem:[%s5 + $0x4] sm:$0xf]
    %v342 = vld [vmem:[%s5 + $0x8] sm:$0xf]
    %v343 = vld [vmem:[%s5 + $0xc] sm:$0xf]
    %v344 = vld [vmem:[%s5 + $0x10] sm:$0xf]
    %v345 = vld [vmem:[%s5 + $0x14] sm:$0xf]
    %v346 = vld [vmem:[%s5 + $0x18] sm:$0xf]
    %v347 = vld [vmem:[%s5 + $0x1c] sm:$0xf]
    %v348 = vld [vmem:[%s6] sm:$0x1]
    %v350 = vlaneseq
    %v351 = vshrl.u32 %v350, 7
    %v352 = vsub.s32 0, %v351
    %v353 = vrot.slane %v348, %v352
    %v363 = vunpack.c.l.b16 %v340
    %v364 = vunpack.c.l.b16 %v341
    %v365 = vunpack.c.l.b16 %v342
    %v366 = vunpack.c.l.b16 %v343
    %v367 = vunpack.c.l.b16 %v344
    %v368 = vunpack.c.l.b16 %v345
    %v369 = vunpack.c.l.b16 %v346
    %v370 = vunpack.c.l.b16 %v347
    %v371 = vpack.c.b16 %v364, %v363
    %v372 = vpack.c.b16 %v366, %v365
    %v373 = vpack.c.b16 %v368, %v367
    %v374 = vpack.c.b16 %v370, %v369
    %vm379 = vcmask 523264
    %v381 = vsel %vm379, %v339, 0
    %383 = vmatprep.subr.bf16.mxu0 0
    %384 = vmatpush1.bf16.msra.mxu0 %v371
    %385 = vmatprep.subr.bf16.mxu0 0
    %386 = vmatpush1.bf16.msra.mxu0 %v372
    %387 = vmatprep.subr.bf16.mxu0 0
    %388 = vmatpush1.bf16.msra.mxu0 %v373
    %389 = vmatprep.subr.bf16.mxu0 0
    %390 = vmatpush1.bf16.msra.mxu0 %v374
    %391 = vmatprep.subr.bf16.mxu0 0
    %392 = vmatpush1.bf16.msra.mxu0 0
    %393 = vmatprep.subr.bf16.mxu0 0
    %394 = vmatpush1.bf16.msra.mxu0 0
    %395 = vmatprep.subr.bf16.mxu0 0
    %396 = vmatpush1.bf16.msra.mxu0 0
    %397 = vmatprep.subr.bf16.mxu0 0
    %398 = vmatpush1.bf16.msra.mxu0 0
    %399 = vmatprep.subr.bf16.mxu0 0
    %400 = vmatpush1.bf16.msra.mxu0 0
    %401 = vmatprep.subr.bf16.mxu0 0
    %402 = vmatpush1.bf16.msra.mxu0 0
    %403 = vmatprep.subr.bf16.mxu0 0
    %404 = vmatpush1.bf16.msra.mxu0 0
    %405 = vmatprep.subr.bf16.mxu0 0
    %406 = vmatpush1.bf16.msra.mxu0 0
    %407 = vmatprep.subr.bf16.mxu0 0
    %408 = vmatpush1.bf16.msra.mxu0 0
    %409 = vmatprep.subr.bf16.mxu0 0
    %410 = vmatpush1.bf16.msra.mxu0 0
    %411 = vmatprep.subr.bf16.mxu0 0
    %412 = vmatpush1.bf16.msra.mxu0 0
    %413 = vmatprep.subr.bf16.mxu0 0
    %414 = vmatpush1.bf16.msra.mxu0 0
    %415 = vmatprep.mubr.bf16.mxu0 0
    %416 = vmatmul.mubr.bf16.gmra.mrb[0].mxu0 %v381
    %v417 = vpop.f32.mrb[0].mxu0
    %v418 = vadd.f32 %v353, %v417
    %v419 = vpop.f32.mrb[0].mxu0
    %v420 = vpop.f32.mrb[0].mxu0
    %v421 = vpop.f32.mrb[0].mxu0
    %422 = vdwg.mxu0
    %423 = vmax.xlane.f32.xlu0 %v418
    %v424 = vpop.xlane.xlu0 %423
    %v425 = vsub.f32 %v418, %v424
    %v426 = vmul.f32 %v425, 1.442695
    %v427 = vpow.pop %v426
    %428 = vadd.xlane.f32.xlu0 %v427
    %v429 = vpop.xlane.xlu0 %428
    %v430 = vrcp.pop %v429
    %v431 = vmul.f32 %v427, %v430
    %432 = vst [vmem:[#allocation5] sm:$0xff] %v431
    // Predicated region
    $region34: #{tpu_custom_call.1} parent=1 // pred_check
      _
    $region35: #{tpu_custom_call.1} parent=1 // pred_check_branch
      %434 = sbr.rel (0) target = $region37
    $region36: #{tpu_custom_call.1} parent=1 // pred_region
      %s436 = ssub.s32 128, 128
      %437 = vsyncadd [#allocation4], %s436
      %s439 = sshll.u32 [#allocation5], 4
      %s440 = int_to_ptr.vmem [resolvable:$true] %s439
      %442 = dma.vmem_to_hbm [thread:$0]  %s440, 128, %s7, [#allocation4]
    $region37: #{tpu_custom_call.1} parent=1 // pred_fallthru
      _
    // Predicated region
    $region38: #{tpu_custom_call.1} parent=1 // pred_check
      _
    $region39: #{tpu_custom_call.1} parent=1 // pred_check_branch
      %444 = sbr.rel (0) target = $region41
    $region40: #{tpu_custom_call.1} parent=1 // pred_region
      %445 = dma.done [#allocation4], 128
    $region41: #{tpu_custom_call.1} parent=1 // pred_fallthru
      _
    %446 = vsyncpa [#allocation3], 1
    %447 = vsyncpa [#allocation4], 1

</llo_original>
